<compile_context>
chip_gen: v6e
topology: v6e:2x2x1
jax: 0.10.0
libtpu: 0.0.40
codegen_flags: <defaults>
</compile_context>

<pallas_src>
import functools

import jax
import jax.numpy as jnp
from jax import lax
from jax.experimental import pallas as pl
from jax.experimental.pallas import tpu as pltpu


def _round_up(a, b):
    return (a + b - 1) // b * b


def _neurotron_kernel(x_ref, v_ref, o_ref, acc_ref, *, h_true):
    """One grid step handles one (batch-block, hidden-block) tile.

    x_ref  : (b_blk, n_pad)   resident across the h axis
    v_ref  : (n_pad, h_blk)   streamed block of V = w-folded A
    o_ref  : (b_blk, 1)       written once, on the last h step
    acc_ref: (b_blk, 1) f32   running sum of relu(pre) over hidden units
    """
    hi = pl.program_id(1)

    @pl.when(hi == 0)
    def _():
        acc_ref[...] = jnp.zeros_like(acc_ref)

    # Lane-dense GEMM in natural MXU orientation: (b_blk, n) x (n, h_blk).
    pre = lax.dot_general(
        x_ref[...], v_ref[...],
        dimension_numbers=(((1,), (0,)), ((), ())),
        preferred_element_type=jnp.float32,
    )

    # ReLU across the full lane-dense tile (VPU), then reduce over the lane
    # (hidden) axis (XLU) into the small accumulator.
    acc_ref[...] += jnp.sum(jnp.maximum(pre, 0.0), axis=-1, keepdims=True)

    @pl.when(hi == pl.num_programs(1) - 1)
    def _():
        o_ref[...] = (acc_ref[...] * (1.0 / h_true)).astype(o_ref.dtype)


def neurotron_forward(w, A, x, *, h_block=512, b_block=256,
                      compute_dtype=jnp.float32):
    """Pallas wrapper. w: (r,), A: (h, r, n), x: (B, n) -> (B,)."""
    h, r, n = A.shape
    B = x.shape[0]

    # Hoist the degenerate (M=1, K=r) w-contraction out of the kernel:
    # V[n, h] = sum_r w[r] * A[h, r, n].  For very large/HBM-bound problems
    # pass compute_dtype=jnp.bfloat16; accumulation stays f32 in the kernel.
    V = jnp.einsum("r,hrn->nh", w, A).astype(compute_dtype)
    xc = x.astype(compute_dtype)

    # TPU-friendly padded shapes (zero padding is inert for a relu-sum).
    n_pad = _round_up(n, 128)                        # contraction axis
    b_blk = min(b_block, _round_up(B, 8))
    B_pad = _round_up(_round_up(B, 8), b_blk)
    h_blk = min(h_block, _round_up(h, 128))          # lane-dense hidden blocks
    h_pad = _round_up(_round_up(h, 128), h_blk)

    xp = jnp.zeros((B_pad, n_pad), compute_dtype).at[:B, :n].set(xc)
    Vp = jnp.zeros((n_pad, h_pad), compute_dtype).at[:n, :h].set(V)

    kernel = functools.partial(_neurotron_kernel, h_true=float(h))

    out = pl.pallas_call(
        kernel,
        out_shape=jax.ShapeDtypeStruct((B_pad, 1), jnp.float32),
        grid=(B_pad // b_blk, h_pad // h_blk),
        in_specs=[
            pl.BlockSpec((b_blk, n_pad), lambda bi, hi: (bi, 0)),  # x resident over h
            pl.BlockSpec((n_pad, h_blk), lambda bi, hi: (0, hi)),  # V streamed over h
        ],
        out_specs=pl.BlockSpec((b_blk, 1), lambda bi, hi: (bi, 0)),
        scratch_shapes=[pltpu.VMEM((b_blk, 1), jnp.float32)],
        compiler_params=pltpu.CompilerParams(
            # Batch axis can shard across TensorCores (v7x); h is the reduction.
            dimension_semantics=("parallel", "arbitrary"),
        ),
    )(xp, Vp)

    return out[:B, 0].astype(x.dtype)


def make_neurotron_params(n, r, h, key, dtype=jnp.float32):
    """Deterministic parameter construction mirroring NeuroTron.__init__."""
    k_m, k_c = jax.random.split(key)
    M = jax.random.normal(k_m, (r, n), dtype=dtype)   # torch.randn(r, n)
    C = jax.random.normal(k_c, (r, n), dtype=dtype)   # torch.randn(r, n) in set_A
    k = h // 2
    factors = jnp.array(
        [f for f in range(-k, k + 1) if f != 0], dtype=dtype
    )  # h factors
    A = M[None, :, :] + factors[:, None, None] * C[None, :, :]   # (h, r, n)
    w = jnp.ones((r,), dtype=dtype)                               # w_init='const'
    return w, A, M


if __name__ == "__main__":
    n, r, h = 8, 6, 10     # NeuroTron(n=8, r=6, h=10)
    B = 16                 # train_batch_size

    key = jax.random.PRNGKey(0)
    k_params, k_x = jax.random.split(key)
    w, A, M = make_neurotron_params(n, r, h, k_params, dtype=jnp.float32)
    x = jax.random.normal(k_x, (B, n), dtype=jnp.float32)

    out = jax.block_until_ready(neurotron_forward(w, A, x))

    # Pure-JAX reference of the torch forward pass.
    pre_ref = jnp.einsum("r,hrn,bn->hb", w, A, x)          # (h, B)
    ref = jnp.mean(jnp.maximum(pre_ref, 0.0), axis=0)      # (B,)

    assert out.shape == (B,)
    assert jnp.allclose(out, ref, atol=1e-5, rtol=1e-5), (out, ref)

    print("KERNEL_OK")
</pallas_src>

<mosaic_0001>
module attributes {stable_mosaic.version = 11 : i64} {
  func.func @_neurotron_kernel(%arg0: i32, %arg1: i32, %arg2: memref<16x128xf32, #tpu.memory_space<vmem>>, %arg3: memref<128x128xf32, #tpu.memory_space<vmem>>, %arg4: memref<16x1xf32, #tpu.memory_space<vmem>>, %arg5: memref<16x1xf32, #tpu.memory_space<vmem>>) attributes {dimension_semantics = [#tpu.dimension_semantics<parallel>, #tpu.dimension_semantics<arbitrary>], iteration_bounds = array<i64: 1, 1>, scalar_prefetch = 0 : i64, scratch_operands = 1 : i64, tpu.core_type = #tpu.core_type<tc>, window_params = [{transform_indices = @transform_0, window_bounds = array<i64: 16, 128>}, {transform_indices = @transform_1, window_bounds = array<i64: 128, 128>}, {transform_indices = @transform_2, window_bounds = array<i64: 16, 1>}]} {
    %c0_i32 = arith.constant 0 : i32
    %0 = arith.cmpi eq, %arg1, %c0_i32 : i32
    %1 = arith.extui %0 : i1 to i32
    %c0_i32_0 = arith.constant 0 : i32
    %2 = arith.cmpi ne, %1, %c0_i32_0 : i32
    scf.if %2 {
      %cst_12 = arith.constant 0.000000e+00 : f32
      %16 = vector.broadcast %cst_12 : f32 to vector<16x1xf32>
      %c0_13 = arith.constant 0 : index
      %c0_14 = arith.constant 0 : index
      %17 = vector.load %arg5[%c0_13, %c0_14] : memref<16x1xf32, #tpu.memory_space<vmem>>, vector<16x1xf32>
      tpu.vector_store %arg5[%c0_13, %c0_14], %16 {strides = array<i32>} : memref<16x1xf32, #tpu.memory_space<vmem>>, vector<16x1xf32>,
    } else {
    }
    %c0 = arith.constant 0 : index
    %c0_1 = arith.constant 0 : index
    %3 = vector.load %arg2[%c0, %c0_1] : memref<16x128xf32, #tpu.memory_space<vmem>>, vector<16x128xf32>
    %c0_2 = arith.constant 0 : index
    %c0_3 = arith.constant 0 : index
    %4 = vector.load %arg3[%c0_2, %c0_3] : memref<128x128xf32, #tpu.memory_space<vmem>>, vector<128x128xf32>
    %cst = arith.constant dense<0.000000e+00> : vector<16x128xf32>
    %5 = tpu.matmul %3, %4, %cst {dimension_numbers = #tpu.dot_dimension_numbers<[1], [0], [0], [1], [0, 0, 1, 1], [], []>} : vector<16x128xf32>, vector<128x128xf32>, vector<16x128xf32> -> vector<16x128xf32>
    %c0_4 = arith.constant 0 : index
    %c0_5 = arith.constant 0 : index
    %6 = vector.load %arg5[%c0_4, %c0_5] : memref<16x1xf32, #tpu.memory_space<vmem>>, vector<16x1xf32>
    %cst_6 = arith.constant 0.000000e+00 : f32
    %7 = vector.broadcast %cst_6 : f32 to vector<16x128xf32>
    %8 = arith.maximumf %5, %7 : vector<16x128xf32>
    %cst_7 = arith.constant dense<0.000000e+00> : vector<16xf32>
    %9 = vector.multi_reduction <add>, %8, %cst_7 [1] : vector<16x128xf32> to vector<16xf32>
    %10 = vector.shape_cast %9 : vector<16xf32> to vector<16x1xf32>
    %11 = arith.addf %6, %10 : vector<16x1xf32>
    %c0_8 = arith.constant 0 : index
    %c0_9 = arith.constant 0 : index
    %12 = vector.load %arg5[%c0_8, %c0_9] : memref<16x1xf32, #tpu.memory_space<vmem>>, vector<16x1xf32>
    tpu.vector_store %arg5[%c0_8, %c0_9], %11 {strides = array<i32>} : memref<16x1xf32, #tpu.memory_space<vmem>>, vector<16x1xf32>,
    %c0_i32_10 = arith.constant 0 : i32
    %13 = arith.cmpi eq, %arg1, %c0_i32_10 : i32
    %14 = arith.extui %13 : i1 to i32
    %c0_i32_11 = arith.constant 0 : i32
    %15 = arith.cmpi ne, %14, %c0_i32_11 : i32
    scf.if %15 {
      %c0_12 = arith.constant 0 : index
      %c0_13 = arith.constant 0 : index
      %16 = vector.load %arg5[%c0_12, %c0_13] : memref<16x1xf32, #tpu.memory_space<vmem>>, vector<16x1xf32>
      %cst_14 = arith.constant 1.000000e-01 : f32
      %17 = vector.broadcast %cst_14 : f32 to vector<16x1xf32>
      %18 = arith.mulf %16, %17 : vector<16x1xf32>
      %c0_15 = arith.constant 0 : index
      %c0_16 = arith.constant 0 : index
      %19 = vector.load %arg4[%c0_15, %c0_16] : memref<16x1xf32, #tpu.memory_space<vmem>>, vector<16x1xf32>
      tpu.vector_store %arg4[%c0_15, %c0_16], %18 {strides = array<i32>} : memref<16x1xf32, #tpu.memory_space<vmem>>, vector<16x1xf32>,
    } else {
    }
    return
  }
  func.func @transform_0(%arg0: i32, %arg1: i32) -> (i32, i32) {
    %c0_i32 = arith.constant 0 : i32
    %c0_i32_0 = arith.constant 0 : i32
    return %arg0, %c0_i32 : i32, i32
  }
  func.func @transform_1(%arg0: i32, %arg1: i32) -> (i32, i32) {
    %c0_i32 = arith.constant 0 : i32
    %c0_i32_0 = arith.constant 0 : i32
    return %c0_i32, %arg1 : i32, i32
  }
  func.func @transform_2(%arg0: i32, %arg1: i32) -> (i32, i32) {
    %c0_i32 = arith.constant 0 : i32
    %c0_i32_0 = arith.constant 0 : i32
    return %arg0, %c0_i32 : i32, i32
  }
}

</mosaic_0001>

<llo_original>
// kernel: tpu_custom_call.1
$region0: #{tpu_custom_call.1}
  #allocation0 [shape = 'u32[]', space=smem, size = 0x4, offset = 0x4, fixed_abs, tag = 'smem constant byte address 0x4 - core index']
  #allocation1 [shape = 'u32[144,128]{1,0:T(1,128)}', space=vmem, size = 0x12000, scoped, tag = 'internal scratch']
  #allocation2 [shape = 'f32[16,1]{1,0:T(8,128)}', space=vmem, size = 0x2000, scoped, tag = 'scratch operand']
  %s0 = inlined_call_operand.hbm [shape: f32[16,128], index: 0, kind: input, shape index: {}]
  %s1 = inlined_call_operand.hbm [shape: f32[128,128], index: 1, kind: input, shape index: {}]
  %s2 = inlined_call_operand.vmem [shape: f32[16,1], index: 2, kind: output, shape index: {}]
  %s3 = sld [smem:[#allocation0]]
  $region34: #{tpu_custom_call.1} parent=0
    _
  %s5 = ssub.s32 1, %s3
  %s6 = scalar_select 0, %s5, %s3
  $region1: #{tpu_custom_call.1} parent=0
    #allocation3 [shape = 'u8[8192]{0}', space=vmem, size = 0x2000, scoped, tag = 'input window, operand 0, single buffered']
    #allocation4 [shape = 's32[1]{0}', space=sflag, size = 0x4, scoped, tag = 'scoped memory for tpu_custom_call.1']
    #allocation5 [shape = 'u8[65536]{0}', space=vmem, size = 0x10000, scoped, tag = 'input window, operand 1, single buffered']
    #allocation6 [shape = 's32[1]{0}', space=sflag, size = 0x4, scoped, tag = 'scoped memory for tpu_custom_call.1']
    %7 = vsyncpa [#allocation4], 0
    %8 = vsyncpa [#allocation6], 0
    // Predicated region
    $region2: #{tpu_custom_call.1} parent=1 // pred_check
      _
    $region3: #{tpu_custom_call.1} parent=1 // pred_check_branch
      %10 = sbr.rel (0) target = $region5
    $region4: #{tpu_custom_call.1} parent=1 // pred_region
      %s12 = ssub.s32 256, 256
      %13 = vsyncadd [#allocation4], %s12
      %s14 = sshll.u32 [#allocation3], 4
      %s15 = int_to_ptr.vmem [resolvable:$true] %s14
      %20 = dma.hbm_to_vmem [thread:$0]  %s0, 256, %s15, [#allocation4], 128, 128, 8
    $region5: #{tpu_custom_call.1} parent=1 // pred_fallthru
      _
    // Predicated region
    $region6: #{tpu_custom_call.1} parent=1 // pred_check
      _
    $region7: #{tpu_custom_call.1} parent=1 // pred_check_branch
      %22 = sbr.rel (0) target = $region9
    $region8: #{tpu_custom_call.1} parent=1 // pred_region
      %s24 = ssub.s32 2048, 2048
      %25 = vsyncadd [#allocation6], %s24
      %s26 = sshll.u32 [#allocation5], 4
      %s27 = int_to_ptr.vmem [resolvable:$true] %s26
      %32 = dma.hbm_to_vmem [thread:$0]  %s1, 2048, %s27, [#allocation6], 128, 128, 8
    $region9: #{tpu_custom_call.1} parent=1 // pred_fallthru
      _
    // Predicated region
    $region10: #{tpu_custom_call.1} parent=1 // pred_check
      _
    $region11: #{tpu_custom_call.1} parent=1 // pred_check_branch
      %34 = sbr.rel (0) target = $region13
    $region12: #{tpu_custom_call.1} parent=1 // pred_region
      %35 = dma.done [#allocation4], 256
    $region13: #{tpu_custom_call.1} parent=1 // pred_fallthru
      _
    // Predicated region
    $region14: #{tpu_custom_call.1} parent=1 // pred_check
      _
    $region15: #{tpu_custom_call.1} parent=1 // pred_check_branch
      %37 = sbr.rel (0) target = $region17
    $region16: #{tpu_custom_call.1} parent=1 // pred_region
      %38 = dma.done [#allocation6], 2048
    $region17: #{tpu_custom_call.1} parent=1 // pred_fallthru
      _
    %p39 = scmp.eq.s32.totalorder 0, 0
    // Predicated region
    $region18: #{tpu_custom_call.1} parent=1 // pred_check
      %p40 = pneg %p39
    $region19: #{tpu_custom_call.1} parent=1 // pred_check_branch
      %42 = sbr.rel (%p40) target = $region21
    $region20: #{tpu_custom_call.1} parent=1 // pred_region
      %vm43 = vcmask 7168
      %44 = vst.msk [vmem:[#allocation2] sm:$0xff] %vm43, 0.0
      %45 = vst.msk [vmem:[#allocation2 + $0x8] sm:$0xff] %vm43, 0.0
    $region21: #{tpu_custom_call.1} parent=1 // pred_fallthru
      _
    %v46 = vld [vmem:[#allocation3] sm:$0xff]
    %v47 = vld [vmem:[#allocation3 + $0x8] sm:$0xff]
    %v48 = vld [vmem:[#allocation5] sm:$0xff]
    %v49 = vld [vmem:[#allocation5 + $0x8] sm:$0xff]
    %v50 = vld [vmem:[#allocation5 + $0x10] sm:$0xff]
    %v51 = vld [vmem:[#allocation5 + $0x18] sm:$0xff]
    %v52 = vld [vmem:[#allocation5 + $0x20] sm:$0xff]
    %v53 = vld [vmem:[#allocation5 + $0x28] sm:$0xff]
    %v54 = vld [vmem:[#allocation5 + $0x30] sm:$0xff]
    %v55 = vld [vmem:[#allocation5 + $0x38] sm:$0xff]
    %v56 = vld [vmem:[#allocation5 + $0x40] sm:$0xff]
    %v57 = vld [vmem:[#allocation5 + $0x48] sm:$0xff]
    %v58 = vld [vmem:[#allocation5 + $0x50] sm:$0xff]
    %v59 = vld [vmem:[#allocation5 + $0x58] sm:$0xff]
    %v60 = vld [vmem:[#allocation5 + $0x60] sm:$0xff]
    %v61 = vld [vmem:[#allocation5 + $0x68] sm:$0xff]
    %v62 = vld [vmem:[#allocation5 + $0x70] sm:$0xff]
    %v63 = vld [vmem:[#allocation5 + $0x78] sm:$0xff]
    %64 = vmatprep.subr.mxu0 0.0
    %65 = vmatpush1.msra.mxu0 %v63
    %66 = vmatprep.subr.mxu0 0.0
    %67 = vmatpush1.msra.mxu0 %v62
    %68 = vmatprep.subr.mxu0 0.0
    %69 = vmatpush1.msra.mxu0 %v61
    %70 = vmatprep.subr.mxu0 0.0
    %71 = vmatpush1.msra.mxu0 %v60
    %72 = vmatprep.subr.mxu0 0.0
    %73 = vmatpush1.msra.mxu0 %v59
    %74 = vmatprep.subr.mxu0 0.0
    %75 = vmatpush1.msra.mxu0 %v58
    %76 = vmatprep.subr.mxu0 0.0
    %77 = vmatpush1.msra.mxu0 %v57
    %78 = vmatprep.subr.mxu0 0.0
    %79 = vmatpush1.msra.mxu0 %v56
    %80 = vmatprep.subr.mxu0 0.0
    %81 = vmatpush1.msra.mxu0 %v55
    %82 = vmatprep.subr.mxu0 0.0
    %83 = vmatpush1.msra.mxu0 %v54
    %84 = vmatprep.subr.mxu0 0.0
    %85 = vmatpush1.msra.mxu0 %v53
    %86 = vmatprep.subr.mxu0 0.0
    %87 = vmatpush1.msra.mxu0 %v52
    %88 = vmatprep.subr.mxu0 0.0
    %89 = vmatpush1.msra.mxu0 %v51
    %90 = vmatprep.subr.mxu0 0.0
    %91 = vmatpush1.msra.mxu0 %v50
    %92 = vmatprep.subr.mxu0 0.0
    %93 = vmatpush1.msra.mxu0 %v49
    %94 = vmatprep.subr.mxu0 0.0
    %95 = vmatpush1.msra.mxu0 %v48
    %96 = vmatprep.subr.mxu0 0.0
    %97 = vmatpush2.msra.mxu0 0.0
    %98 = vmatprep.subr.mxu0 0.0
    %99 = vmatpush2.msra.mxu0 0.0
    %100 = vmatprep.subr.mxu0 0.0
    %101 = vmatpush2.msra.mxu0 0.0
    %102 = vmatprep.subr.mxu0 0.0
    %103 = vmatpush2.msra.mxu0 0.0
    %104 = vmatprep.subr.mxu0 0.0
    %105 = vmatpush2.msra.mxu0 0.0
    %106 = vmatprep.subr.mxu0 0.0
    %107 = vmatpush2.msra.mxu0 0.0
    %108 = vmatprep.subr.mxu0 0.0
    %109 = vmatpush2.msra.mxu0 0.0
    %110 = vmatprep.subr.mxu0 0.0
    %111 = vmatpush2.msra.mxu0 0.0
    %112 = vmatprep.subr.mxu0 0.0
    %113 = vmatpush2.msra.mxu0 0.0
    %114 = vmatprep.subr.mxu0 0.0
    %115 = vmatpush2.msra.mxu0 0.0
    %116 = vmatprep.subr.mxu0 0.0
    %117 = vmatpush2.msra.mxu0 0.0
    %118 = vmatprep.subr.mxu0 0.0
    %119 = vmatpush2.msra.mxu0 0.0
    %120 = vmatprep.subr.mxu0 0.0
    %121 = vmatpush2.msra.mxu0 0.0
    %122 = vmatprep.subr.mxu0 0.0
    %123 = vmatpush2.msra.mxu0 0.0
    %124 = vmatprep.subr.mxu0 0.0
    %125 = vmatpush2.msra.mxu0 0.0
    %126 = vmatprep.subr.mxu0 0.0
    %127 = vmatpush2.msra.mxu0 0.0
    %128 = vmatprep.mubr.f32.mxu0 0.0
    %129 = vmatmul.mubr.f32.gmra.mxu0 %v46
    %v130 = vpop.f32.mrf.mxu0
    %v131 = vadd.f32 0.0, %v130
    %v132 = vpop.f32.mrf.mxu0
    %133 = vmatprep.mubr.f32.mxu0 0.0
    %134 = vmatmul.mubr.f32.gmra.mxu0 %v47
    %v135 = vpop.f32.mrf.mxu0
    %v136 = vadd.f32 0.0, %v135
    %v137 = vpop.f32.mrf.mxu0
    %138 = vdwg.mxu0
    %v139 = vld [vmem:[#allocation2] sm:$0xff]
    %v140 = vld [vmem:[#allocation2 + $0x8] sm:$0xff]
    %v141 = vmax.f32 %v131, 0.0
    %v142 = vmax.f32 %v136, 0.0
    %143 = vadd.xlane.f32.xlu0 %v141
    %v144 = vpop.xlane.xlu0 %143
    %145 = vadd.xlane.f32.xlu0 %v142
    %v146 = vpop.xlane.xlu0 %145
    %v147 = vadd.f32 %v139, %v144
    %v148 = vadd.f32 %v140, %v146
    %vm149 = vcmask 7168
    %150 = vst.msk [vmem:[#allocation2] sm:$0xff] %vm149, %v147
    %151 = vst.msk [vmem:[#allocation2 + $0x8] sm:$0xff] %vm149, %v148
    // Predicated region
    $region22: #{tpu_custom_call.1} parent=1 // pred_check
      %p152 = pneg %p39
    $region23: #{tpu_custom_call.1} parent=1 // pred_check_branch
      %154 = sbr.rel (%p152) target = $region25
    $region24: #{tpu_custom_call.1} parent=1 // pred_region
      %v155 = vld [vmem:[#allocation2] sm:$0xff]
      %v156 = vld [vmem:[#allocation2 + $0x8] sm:$0xff]
      %v157 = vmul.f32 %v155, 0.1
      %v158 = vmul.f32 %v156, 0.1
      %159 = vst.msk [vmem:[%s2] sm:$0xff] %vm149, %v157
      %160 = vst.msk [vmem:[%s2 + $0x8] sm:$0xff] %vm149, %v158
    $region25: #{tpu_custom_call.1} parent=1 // pred_fallthru
      _
    // Predicated region
    $region26: #{tpu_custom_call.1} parent=1 // pred_check
      _
    $region27: #{tpu_custom_call.1} parent=1 // pred_check_branch
      %162 = sbr.rel (0) target = $region29
    $region28: #{tpu_custom_call.1} parent=1 // pred_region
      _
    $region29: #{tpu_custom_call.1} parent=1 // pred_fallthru
      _
    // Predicated region
    $region30: #{tpu_custom_call.1} parent=1 // pred_check
      _
    $region31: #{tpu_custom_call.1} parent=1 // pred_check_branch
      %164 = sbr.rel (0) target = $region33
    $region32: #{tpu_custom_call.1} parent=1 // pred_region
      _
    $region33: #{tpu_custom_call.1} parent=1 // pred_fallthru
      _
    %165 = vsyncpa [#allocation4], 1
    %166 = vsyncpa [#allocation6], 1

</llo_original>
